<compile_context>
chip_gen: v7x
topology: tpu7x:2x2x1
jax: 0.10.0
libtpu: 0.0.40
codegen_flags: <defaults>
</compile_context>

<pallas_src>
import functools

import jax
import jax.numpy as jnp
from jax.experimental import pallas as pl
from jax.experimental.pallas import tpu as pltpu


# --------------------------------------------------------------------------------------
# Pass 1: conv-as-matmul (bf16 MXU operands, f32 accumulation) + per-tile BN stats.
# --------------------------------------------------------------------------------------
def conv_stats_kernel(w_ref, x_ref, y_ref, sum_ref, ssq_ref):
    # w_ref:   (F, K)          bf16  conv weight (OIHW flattened, resident)
    # x_ref:   (1, K, Thw)     bf16  im2col patch tile of one image
    # y_ref:   (1, F, Thw)     bf16  conv output tile (lane-dense)
    # sum_ref: (1, 1, F, 1)    f32   per-(n, tile) partial sum per filter
    # ssq_ref: (1, 1, F, 1)    f32   per-(n, tile) partial sum of squares per filter
    y = jnp.dot(w_ref[...], x_ref[0], preferred_element_type=jnp.float32)  # (F, Thw) f32
    y_ref[0] = y.astype(y_ref.dtype)                                       # bf16 store
    # Stats reduced in f32 BEFORE the bf16 cast of y.
    sum_ref[...] = jnp.sum(y, axis=1, keepdims=True)[None, None]           # (1,1,F,1)
    ssq_ref[...] = jnp.sum(y * y, axis=1, keepdims=True)[None, None]       # (1,1,F,1)


# --------------------------------------------------------------------------------------
# Pass 2: BatchNorm (folded into scale/shift) + LeakyReLU(0.2), direct NCHW-layout write.
# --------------------------------------------------------------------------------------
def bn_act_kernel(scale_ref, shift_ref, y_ref, o_ref):
    # scale_ref: (F, 1) f32   gamma / sqrt(var + eps)
    # shift_ref: (F, 1) f32   beta - mean * scale
    # y_ref:     (1, F, Thw) bf16
    # o_ref:     (1, F, Thw) f32   (N, F, H*W) output block -> NCHW via metadata reshape
    z = y_ref[0].astype(jnp.float32) * scale_ref[...] + shift_ref[...]
    o_ref[0] = jnp.where(z >= 0, z, 0.2 * z)


# --------------------------------------------------------------------------------------
# JAX glue
# --------------------------------------------------------------------------------------
def im2col_nchw(x_bf16, k, pad):
    """(N, C, H, W) bf16 -> (N, C*k*k, Ho*Wo) bf16, stride=1.

    K rows are ordered (c, ki, kj) to match PyTorch OIHW weight flattening; columns are
    (h, w) row-major per image.
    """
    N, C, H, W = x_bf16.shape
    Ho = H + 2 * pad - k + 1
    Wo = W + 2 * pad - k + 1
    xp = jnp.pad(x_bf16, ((0, 0), (0, 0), (pad, pad), (pad, pad)))
    cols = [xp[:, :, i:i + Ho, j:j + Wo] for i in range(k) for j in range(k)]
    p = jnp.stack(cols, axis=2)                          # (N, C, k*k, Ho, Wo)
    return p.reshape(N, C * k * k, Ho * Wo), Ho, Wo      # (N, K, HWo)


def _pick_tile_hw(hw, n_batch, k_dim, f_dim, target):
    """Lane-dense tile over the flattened spatial axis.

    - divides hw exactly (no padding, so the output is written directly in NCHW layout)
    - multiple of 128 whenever possible (unmasked vst)
    - double-buffered footprint kept well under v7x's 64 MiB VMEM
    - >= 2 total grid steps when possible so v7x's two TensorCores both get work
    """
    # Rough per-lane-column bytes across the two passes (double-buffered).
    bytes_per_col = max(2 * 2 * (k_dim + f_dim),        # pass 1: K + F in bf16
                        2 * (2 * f_dim + 4 * f_dim))    # pass 2: bf16 in + f32 out
    vmem_cap = max(128, (24 * 1024 * 1024) // bytes_per_col)
    target = max(128, min(int(target), vmem_cap))

    if hw <= target:
        tile = hw
    else:
        tile = 0
        cand = (target // 128) * 128
        while cand >= 128:
            if hw % cand == 0:
                tile = cand
                break
            cand -= 128
        if tile == 0:
            tile = hw  # rare fallback: hw has no multiple-of-128 divisor <= target

    if n_batch * (hw // tile) < 2 and tile % 256 == 0:
        tile //= 2   # make sure both v7x TensorCores get at least one step
    return tile


def conv_block_forward(x, conv_w, conv_b, bn_gamma, bn_beta, *,
                       filter_size=3, padding=1, target_tile_hw=16384):
    """x: (N, C, H, W) NCHW, stride=1. Returns (N, F, Ho, Wo) NCHW (== input dims for
    the module defaults). Matches ConvBlock: Conv2d -> BatchNorm2d(train stats) ->
    LeakyReLU(0.2).

    conv_b is accepted for API parity but unused: train-mode BN subtracts the batch
    mean, so the conv bias cancels in the forward activation.
    """
    del conv_b
    N, C, H, W = x.shape
    F = conv_w.shape[0]
    k = filter_size
    K = C * k * k

    # bf16 BEFORE im2col so the k*k-duplicated intermediate is half-width in HBM.
    patches, Ho, Wo = im2col_nchw(x.astype(jnp.bfloat16), k, padding)  # (N, K, HWo) bf16
    HWo = Ho * Wo
    M = N * HWo

    t_hw = _pick_tile_hw(HWo, N, K, F, target_tile_hw)
    T = HWo // t_hw

    w2d = conv_w.reshape(F, K).astype(jnp.bfloat16)                    # (F, K) bf16

    # ---------------- pass 1: conv + partial BN stats ----------------
    y_bf16, psum, pssq = pl.pallas_call(
        conv_stats_kernel,
        out_shape=(
            jax.ShapeDtypeStruct((N, F, HWo), jnp.bfloat16),
            jax.ShapeDtypeStruct((N, T, F, 1), jnp.float32),
            jax.ShapeDtypeStruct((N, T, F, 1), jnp.float32),
        ),
        grid_spec=pltpu.PrefetchScalarGridSpec(
            num_scalar_prefetch=0,
            grid=(N, T),
            in_specs=[
                pl.BlockSpec((F, K), lambda n, t: (0, 0)),           # weight resident
                pl.BlockSpec((1, K, t_hw), lambda n, t: (n, 0, t)),  # patch tile
            ],
            out_specs=[
                pl.BlockSpec((1, F, t_hw), lambda n, t: (n, 0, t)),  # lane-dense y tile
                pl.BlockSpec((1, 1, F, 1), lambda n, t: (n, t, 0, 0)),
                pl.BlockSpec((1, 1, F, 1), lambda n, t: (n, t, 0, 0)),
            ],
        ),
        compiler_params=pltpu.CompilerParams(
            dimension_semantics=("parallel", "parallel"),
            vmem_limit_bytes=32 * 1024 * 1024,
        ),
        cost_estimate=pl.CostEstimate(
            flops=2 * M * K * F,
            transcendentals=0,
            bytes_accessed=(patches.size * 2 + w2d.size * 2
                            + N * F * HWo * 2 + 2 * N * T * F * 4),
        ),
    )(w2d, patches)

    # ---------------- tiny stats finalization (O(F)) ----------------
    sums = jnp.sum(psum, axis=(0, 1))[:, 0]                   # (F,)
    sumsq = jnp.sum(pssq, axis=(0, 1))[:, 0]                  # (F,)
    mean = sums / M
    var = jnp.maximum(sumsq / M - mean * mean, 0.0)           # biased, train-mode BN
    inv_std = jax.lax.rsqrt(var + 1e-5)
    g = bn_gamma.astype(jnp.float32)
    b = bn_beta.astype(jnp.float32)
    scale = (g * inv_std).reshape(F, 1)
    shift = (b - mean * g * inv_std).reshape(F, 1)

    # ---------------- pass 2: normalize + LeakyReLU, direct NCHW layout ----------------
    out_flat = pl.pallas_call(
        bn_act_kernel,
        out_shape=jax.ShapeDtypeStruct((N, F, HWo), jnp.float32),
        grid_spec=pltpu.PrefetchScalarGridSpec(
            num_scalar_prefetch=0,
            grid=(N, T),
            in_specs=[
                pl.BlockSpec((F, 1), lambda n, t: (0, 0)),
                pl.BlockSpec((F, 1), lambda n, t: (0, 0)),
                pl.BlockSpec((1, F, t_hw), lambda n, t: (n, 0, t)),
            ],
            out_specs=pl.BlockSpec((1, F, t_hw), lambda n, t: (n, 0, t)),
        ),
        compiler_params=pltpu.CompilerParams(
            dimension_semantics=("parallel", "parallel"),
            vmem_limit_bytes=32 * 1024 * 1024,
        ),
        cost_estimate=pl.CostEstimate(
            flops=3 * F * M,
            transcendentals=0,
            bytes_accessed=N * F * HWo * (2 + 4) + 2 * F * 4,
        ),
    )(scale, shift, y_bf16)

    # (N, F, Ho*Wo) -> (N, F, Ho, Wo): same memory layout, metadata-only reshape.
    return out_flat.reshape(N, F, Ho, Wo)


if __name__ == "__main__":
    # Shapes consistent with ConvBlock(channels=4, num_filters=8, filter_size=3).
    N, C, H, W = 2, 4, 16, 16
    F, k, pad = 8, 3, 1

    key = jax.random.PRNGKey(0)
    kx, kw, kb = jax.random.split(key, 3)

    x = jax.random.normal(kx, (N, C, H, W), dtype=jnp.float32)

    # Parameter init mirroring init_weights(): Conv ~ N(0, 0.02); BN weight ~ N(1, 0.02), bias 0.
    conv_w = 0.02 * jax.random.normal(kw, (F, C, k, k), dtype=jnp.float32)
    conv_b = 0.01 * jax.random.normal(kb, (F,), dtype=jnp.float32)
    bn_gamma = 1.0 + 0.02 * jax.random.normal(jax.random.PRNGKey(1), (F,), dtype=jnp.float32)
    bn_beta = jnp.zeros((F,), dtype=jnp.float32)

    fwd = jax.jit(functools.partial(conv_block_forward, filter_size=k, padding=pad))
    out = fwd(x, conv_w, conv_b, bn_gamma, bn_beta)
    jax.block_until_ready(out)
    assert out.shape == (N, F, H, W), out.shape

    # Pure-JAX f32 reference (conv + bias + train-mode BN + LeakyReLU).  Loose tolerance:
    # the kernel uses bf16 MXU operands and a bf16 y intermediate.
    y_ref = jax.lax.conv_general_dilated(
        x, conv_w, window_strides=(1, 1), padding=((pad, pad), (pad, pad)),
        dimension_numbers=("NCHW", "OIHW", "NCHW"),
        precision=jax.lax.Precision.HIGHEST) + conv_b.reshape(1, F, 1, 1)
    mu = y_ref.mean(axis=(0, 2, 3), keepdims=True)
    vr = ((y_ref - mu) ** 2).mean(axis=(0, 2, 3), keepdims=True)
    y_bn = (y_ref - mu) * jax.lax.rsqrt(vr + 1e-5) * bn_gamma.reshape(1, F, 1, 1) \
        + bn_beta.reshape(1, F, 1, 1)
    ref = jnp.where(y_bn >= 0, y_bn, 0.2 * y_bn)
    err = float(jnp.max(jnp.abs(out - ref)))
    assert err < 1e-1, f"max abs error vs reference too large: {err}"

    print("KERNEL_OK")
</pallas_src>

<mosaic_0001>
module attributes {stable_mosaic.version = 11 : i64} {
  func.func @conv_stats_kernel(%arg0: i32, %arg1: i32, %arg2: memref<8x36xbf16, #tpu.memory_space<vmem>>, %arg3: memref<1x36x256xbf16, #tpu.memory_space<vmem>>, %arg4: memref<1x8x256xbf16, #tpu.memory_space<vmem>>, %arg5: memref<1x1x8x1xf32, #tpu.memory_space<vmem>>, %arg6: memref<1x1x8x1xf32, #tpu.memory_space<vmem>>) attributes {dimension_semantics = [#tpu.dimension_semantics<parallel>, #tpu.dimension_semantics<parallel>], iteration_bounds = array<i64: 2, 1>, scalar_prefetch = 0 : i64, scratch_operands = 0 : i64, tpu.core_type = #tpu.core_type<tc>, window_params = [{pipeline_mode = #tpu.pipeline_mode<synchronous>, transform_indices = @transform_0, window_bounds = array<i64: 8, 36>}, {transform_indices = @transform_1, window_bounds = array<i64: 1, 36, 256>}, {transform_indices = @transform_2, window_bounds = array<i64: 1, 8, 256>}, {transform_indices = @transform_3, window_bounds = array<i64: 1, 1, 8, 1>}, {transform_indices = @transform_4, window_bounds = array<i64: 1, 1, 8, 1>}]} {
    %c0 = arith.constant 0 : index
    %c0_0 = arith.constant 0 : index
    %0 = vector.load %arg2[%c0, %c0_0] : memref<8x36xbf16, #tpu.memory_space<vmem>>, vector<8x36xbf16>
    %c0_1 = arith.constant 0 : index
    %c0_2 = arith.constant 0 : index
    %c0_3 = arith.constant 0 : index
    %1 = vector.load %arg3[%c0_1, %c0_2, %c0_3] : memref<1x36x256xbf16, #tpu.memory_space<vmem>>, vector<1x36x256xbf16>
    %2 = vector.shape_cast %1 : vector<1x36x256xbf16> to vector<36x256xbf16>
    %cst = arith.constant dense<0.000000e+00> : vector<8x256xf32>
    %3 = tpu.matmul %0, %2, %cst {dimension_numbers = #tpu.dot_dimension_numbers<[1], [0], [0], [1], [0, 0, 1, 1], [], []>} : vector<8x36xbf16>, vector<36x256xbf16>, vector<8x256xf32> -> vector<8x256xf32>
    %4 = arith.truncf %3 : vector<8x256xf32> to vector<8x256xbf16>
    %c0_4 = arith.constant 0 : index
    %c0_5 = arith.constant 0 : index
    %c0_6 = arith.constant 0 : index
    %5 = vector.load %arg4[%c0_4, %c0_5, %c0_6] : memref<1x8x256xbf16, #tpu.memory_space<vmem>>, vector<1x8x256xbf16>
    %6 = vector.shape_cast %5 : vector<1x8x256xbf16> to vector<8x256xbf16>
    %7 = vector.shape_cast %4 : vector<8x256xbf16> to vector<1x8x256xbf16>
    tpu.vector_store %arg4[%c0_4, %c0_5, %c0_6], %7 {strides = array<i32>} : memref<1x8x256xbf16, #tpu.memory_space<vmem>>, vector<1x8x256xbf16>,
    %cst_7 = arith.constant dense<0.000000e+00> : vector<8xf32>
    %8 = vector.multi_reduction <add>, %3, %cst_7 [1] : vector<8x256xf32> to vector<8xf32>
    %9 = vector.shape_cast %8 : vector<8xf32> to vector<8x1xf32>
    %10 = vector.shape_cast %9 : vector<8x1xf32> to vector<1x1x8x1xf32>
    %c0_8 = arith.constant 0 : index
    %c0_9 = arith.constant 0 : index
    %c0_10 = arith.constant 0 : index
    %c0_11 = arith.constant 0 : index
    %11 = vector.load %arg5[%c0_8, %c0_9, %c0_10, %c0_11] : memref<1x1x8x1xf32, #tpu.memory_space<vmem>>, vector<1x1x8x1xf32>
    tpu.vector_store %arg5[%c0_8, %c0_9, %c0_10, %c0_11], %10 {strides = array<i32>} : memref<1x1x8x1xf32, #tpu.memory_space<vmem>>, vector<1x1x8x1xf32>,
    %12 = arith.mulf %3, %3 : vector<8x256xf32>
    %cst_12 = arith.constant dense<0.000000e+00> : vector<8xf32>
    %13 = vector.multi_reduction <add>, %12, %cst_12 [1] : vector<8x256xf32> to vector<8xf32>
    %14 = vector.shape_cast %13 : vector<8xf32> to vector<8x1xf32>
    %15 = vector.shape_cast %14 : vector<8x1xf32> to vector<1x1x8x1xf32>
    %c0_13 = arith.constant 0 : index
    %c0_14 = arith.constant 0 : index
    %c0_15 = arith.constant 0 : index
    %c0_16 = arith.constant 0 : index
    %16 = vector.load %arg6[%c0_13, %c0_14, %c0_15, %c0_16] : memref<1x1x8x1xf32, #tpu.memory_space<vmem>>, vector<1x1x8x1xf32>
    tpu.vector_store %arg6[%c0_13, %c0_14, %c0_15, %c0_16], %15 {strides = array<i32>} : memref<1x1x8x1xf32, #tpu.memory_space<vmem>>, vector<1x1x8x1xf32>,
    return
  }
  func.func @transform_0(%arg0: i32, %arg1: i32) -> (i32, i32) {
    %c0_i32 = arith.constant 0 : i32
    %c0_i32_0 = arith.constant 0 : i32
    %c0_i32_1 = arith.constant 0 : i32
    return %c0_i32, %c0_i32_0 : i32, i32
  }
  func.func @transform_1(%arg0: i32, %arg1: i32) -> (i32, i32, i32) {
    %c0_i32 = arith.constant 0 : i32
    %c0_i32_0 = arith.constant 0 : i32
    return %arg0, %c0_i32, %arg1 : i32, i32, i32
  }
  func.func @transform_2(%arg0: i32, %arg1: i32) -> (i32, i32, i32) {
    %c0_i32 = arith.constant 0 : i32
    %c0_i32_0 = arith.constant 0 : i32
    return %arg0, %c0_i32, %arg1 : i32, i32, i32
  }
  func.func @transform_3(%arg0: i32, %arg1: i32) -> (i32, i32, i32, i32) {
    %c0_i32 = arith.constant 0 : i32
    %c0_i32_0 = arith.constant 0 : i32
    %c0_i32_1 = arith.constant 0 : i32
    return %arg0, %arg1, %c0_i32, %c0_i32_0 : i32, i32, i32, i32
  }
  func.func @transform_4(%arg0: i32, %arg1: i32) -> (i32, i32, i32, i32) {
    %c0_i32 = arith.constant 0 : i32
    %c0_i32_0 = arith.constant 0 : i32
    %c0_i32_1 = arith.constant 0 : i32
    return %arg0, %arg1, %c0_i32, %c0_i32_0 : i32, i32, i32, i32
  }
}

module attributes {stable_mosaic.version = 11 : i64} {
  func.func @bn_act_kernel(%arg0: i32, %arg1: i32, %arg2: memref<8x1xf32, #tpu.memory_space<vmem>>, %arg3: memref<8x1xf32, #tpu.memory_space<vmem>>, %arg4: memref<1x8x256xbf16, #tpu.memory_space<vmem>>, %arg5: memref<1x8x256xf32, #tpu.memory_space<vmem>>) attributes {dimension_semantics = [#tpu.dimension_semantics<parallel>, #tpu.dimension_semantics<parallel>], iteration_bounds = array<i64: 2, 1>, scalar_prefetch = 0 : i64, scratch_operands = 0 : i64, tpu.core_type = #tpu.core_type<tc>, window_params = [{pipeline_mode = #tpu.pipeline_mode<synchronous>, transform_indices = @transform_0, window_bounds = array<i64: 8, 1>}, {pipeline_mode = #tpu.pipeline_mode<synchronous>, transform_indices = @transform_1, window_bounds = array<i64: 8, 1>}, {transform_indices = @transform_2, window_bounds = array<i64: 1, 8, 256>}, {transform_indices = @transform_3, window_bounds = array<i64: 1, 8, 256>}]} {
    %c0 = arith.constant 0 : index
    %c0_0 = arith.constant 0 : index
    %c0_1 = arith.constant 0 : index
    %0 = vector.load %arg4[%c0, %c0_0, %c0_1] : memref<1x8x256xbf16, #tpu.memory_space<vmem>>, vector<1x8x256xbf16>
    %1 = vector.shape_cast %0 : vector<1x8x256xbf16> to vector<8x256xbf16>
    %2 = arith.extf %1 : vector<8x256xbf16> to vector<8x256xf32>
    %c0_2 = arith.constant 0 : index
    %c0_3 = arith.constant 0 : index
    %3 = vector.load %arg2[%c0_2, %c0_3] : memref<8x1xf32, #tpu.memory_space<vmem>>, vector<8x1xf32>
    %4 = vector.broadcast %3 : vector<8x1xf32> to vector<8x256xf32>
    %5 = arith.mulf %2, %4 : vector<8x256xf32>
    %c0_4 = arith.constant 0 : index
    %c0_5 = arith.constant 0 : index
    %6 = vector.load %arg3[%c0_4, %c0_5] : memref<8x1xf32, #tpu.memory_space<vmem>>, vector<8x1xf32>
    %7 = vector.broadcast %6 : vector<8x1xf32> to vector<8x256xf32>
    %8 = arith.addf %5, %7 : vector<8x256xf32>
    %cst = arith.constant 0.000000e+00 : f32
    %9 = vector.broadcast %cst : f32 to vector<8x256xf32>
    %10 = arith.cmpf oge, %8, %9 : vector<8x256xf32>
    %cst_6 = arith.constant 2.000000e-01 : f32
    %11 = vector.broadcast %cst_6 : f32 to vector<8x256xf32>
    %12 = arith.mulf %11, %8 : vector<8x256xf32>
    %13 = arith.select %10, %8, %12 : vector<8x256xi1>, vector<8x256xf32>
    %c0_7 = arith.constant 0 : index
    %c0_8 = arith.constant 0 : index
    %c0_9 = arith.constant 0 : index
    %14 = vector.load %arg5[%c0_7, %c0_8, %c0_9] : memref<1x8x256xf32, #tpu.memory_space<vmem>>, vector<1x8x256xf32>
    %15 = vector.shape_cast %14 : vector<1x8x256xf32> to vector<8x256xf32>
    %16 = vector.shape_cast %13 : vector<8x256xf32> to vector<1x8x256xf32>
    tpu.vector_store %arg5[%c0_7, %c0_8, %c0_9], %16 {strides = array<i32>} : memref<1x8x256xf32, #tpu.memory_space<vmem>>, vector<1x8x256xf32>,
    return
  }
  func.func @transform_0(%arg0: i32, %arg1: i32) -> (i32, i32) {
    %c0_i32 = arith.constant 0 : i32
    %c0_i32_0 = arith.constant 0 : i32
    %c0_i32_1 = arith.constant 0 : i32
    return %c0_i32, %c0_i32_0 : i32, i32
  }
  func.func @transform_1(%arg0: i32, %arg1: i32) -> (i32, i32) {
    %c0_i32 = arith.constant 0 : i32
    %c0_i32_0 = arith.constant 0 : i32
    %c0_i32_1 = arith.constant 0 : i32
    return %c0_i32, %c0_i32_0 : i32, i32
  }
  func.func @transform_2(%arg0: i32, %arg1: i32) -> (i32, i32, i32) {
    %c0_i32 = arith.constant 0 : i32
    %c0_i32_0 = arith.constant 0 : i32
    return %arg0, %c0_i32, %arg1 : i32, i32, i32
  }
  func.func @transform_3(%arg0: i32, %arg1: i32) -> (i32, i32, i32) {
    %c0_i32 = arith.constant 0 : i32
    %c0_i32_0 = arith.constant 0 : i32
    return %arg0, %c0_i32, %arg1 : i32, i32, i32
  }
}

</mosaic_0001>

<llo_original>
// kernel: conv_block_forward.3
$region0: #{conv_block_forward.3}
  #allocation0 [shape = 'u32[]', space=smem, size = 0x4, offset = 0x4, fixed_abs, tag = 'smem constant byte address 0x4 - core index']
  #allocation1 [shape = 'u32[144,128]{1,0:T(1,128)}', space=vmem, size = 0x12000, scoped, tag = 'internal scratch']
  %s0 = inlined_call_operand.vmem [shape: f32[8,1], index: 0, kind: input, shape index: {}]
  %s1 = inlined_call_operand.vmem [shape: f32[8,1], index: 1, kind: input, shape index: {}]
  %s2 = inlined_call_operand.vmem [shape: bf16[2,8,256], index: 2, kind: input, shape index: {}]
  %s3 = inlined_call_operand.vmem [shape: f32[2,8,256], index: 3, kind: output, shape index: {}]
  %s4 = sld [smem:[#allocation0]]
  $region45: #{conv_block_forward.3} parent=0
    _
  %s6 = ssub.s32 1, %s4
  %s7 = scalar_select 0, %s6, %s4
  loop: start=0, step=1, limit=4
  $region2: #{conv_block_forward.3} parent=0 // loop_pre_header
    _
  $region3: #{conv_block_forward.3} parent=0 // loop_header
    %s9 = sphi 0, %s13
    %p10 = scmp.ge.s32.totalorder %s9, 4
    %s16 = sphi 0, %s28
    %s17 = sphi 0, %s24
    %s18 = sphi 0, %s16
    %s19 = sphi 0, %s17
    %s20 = sphi 0, %s18
    %s21 = sphi 0, %s19
    %s29 = sphi 0, %s29
    %s31 = sphi 0, %s29
    %s32 = sphi 0, %s31
    %s46 = sphi 0, %s32
    %s50 = sphi 0, %s50
    %s52 = sphi 0, %s50
    %s53 = sphi 0, %s52
    %s67 = sphi 0, %s53
    %s75 = sphi 0, %s77
    %s78 = sphi 0, %s75
    %s79 = sphi 0, %s78
    %s95 = sphi 0, %s79
    %s103 = sphi 0, %s105
    %s106 = sphi 0, %s103
    %s107 = sphi 0, %s106
    %s123 = sphi 0, %s107
  $region4: #{conv_block_forward.3} parent=0 // loop_header_branch
    %12 = sbr.rel (%p10) target = $region8
  $region5: #{conv_block_forward.3} parent=0 // loop_body
    %s14 = ssub.s32 %s9, 1
    %s15 = ssub.s32 %s9, 2
    %s22 = sadd.s32 1, %s17
    %p23 = scmp.ge.s32.totalorder %s22, 1
    %s24 = scalar_select %p23, 0, %s22
    %s25 = sadd.s32 1, %s16
    %s26 = scalar_select %p23, %s25, %s16
    %p27 = scmp.ge.s32.totalorder %s26, 2
    %s28 = scalar_select %p27, 0, %s26
    %s30 = sadd.s32 %s29, 1
    %p33 = scmp.eq.s32.totalorder %s9, 1
    %p34 = scmp.ne.s32.totalorder %s29, %s31
    %p35 = scmp.eq.s32.totalorder %s9, 0
    %p36 = por %p34, %p35
    %p37 = scmp.ne.s32.totalorder %s29, %s31
    %p38 = scmp.eq.s32.totalorder %s14, 1
    %p39 = por %p37, %p38
    %p40 = scmp.ne.s32.totalorder %s31, %s32
    %p41 = scmp.eq.s32.totalorder %s14, 0
    %p42 = por %p40, %p41
    %p43 = scmp.ne.s32.totalorder %s31, %s32
    %p44 = scmp.eq.s32.totalorder %s15, 1
    %p45 = por %p43, %p44
    %p47 = scmp.ne.s32.totalorder %s32, %s46
    %p48 = scmp.eq.s32.totalorder %s15, 0
    %p49 = por %p47, %p48
    %s51 = sadd.s32 %s50, 1
    %p54 = scmp.eq.s32.totalorder %s9, 1
    %p55 = scmp.ne.s32.totalorder %s50, %s52
    %p56 = scmp.eq.s32.totalorder %s9, 0
    %p57 = por %p55, %p56
    %p58 = scmp.ne.s32.totalorder %s50, %s52
    %p59 = scmp.eq.s32.totalorder %s14, 1
    %p60 = por %p58, %p59
    %p61 = scmp.ne.s32.totalorder %s52, %s53
    %p62 = scmp.eq.s32.totalorder %s14, 0
    %p63 = por %p61, %p62
    %p64 = scmp.ne.s32.totalorder %s52, %s53
    %p65 = scmp.eq.s32.totalorder %s15, 1
    %p66 = por %p64, %p65
    %p68 = scmp.ne.s32.totalorder %s53, %s67
    %p69 = scmp.eq.s32.totalorder %s15, 0
    %p70 = por %p68, %p69
    %s71 = ssub.s32 %s16, %s28
    %s72 = ssub.s32 %s17, %s24
    %s73 = sor.u32 %s71, %s72
    %p74 = scmp.eq.s32.totalorder %s73, 0
    %s76 = sadd.s32 %s75, 1
    %s77 = scalar_select %p74, %s75, %s76
    %p80 = pneg %p74
    %p81 = scmp.eq.s32.totalorder %s9, 1
    %p82 = por %p80, %p81
    %p83 = scmp.ne.s32.totalorder %s75, %s78
    %p84 = scmp.eq.s32.totalorder %s9, 0
    %p85 = por %p83, %p84
    %p86 = scmp.ne.s32.totalorder %s75, %s78
    %p87 = scmp.eq.s32.totalorder %s14, 1
    %p88 = por %p86, %p87
    %p89 = scmp.ne.s32.totalorder %s78, %s79
    %p90 = scmp.eq.s32.totalorder %s14, 0
    %p91 = por %p89, %p90
    %p92 = scmp.ne.s32.totalorder %s78, %s79
    %p93 = scmp.eq.s32.totalorder %s15, 1
    %p94 = por %p92, %p93
    %p96 = scmp.ne.s32.totalorder %s79, %s95
    %p97 = scmp.eq.s32.totalorder %s15, 0
    %p98 = por %p96, %p97
    %s99 = ssub.s32 %s16, %s28
    %s100 = ssub.s32 %s17, %s24
    %s101 = sor.u32 %s99, %s100
    %p102 = scmp.eq.s32.totalorder %s101, 0
    %s104 = sadd.s32 %s103, 1
    %s105 = scalar_select %p102, %s103, %s104
    %p108 = pneg %p102
    %p109 = scmp.eq.s32.totalorder %s9, 1
    %p110 = por %p108, %p109
    %p111 = scmp.ne.s32.totalorder %s103, %s106
    %p112 = scmp.eq.s32.totalorder %s9, 0
    %p113 = por %p111, %p112
    %p114 = scmp.ne.s32.totalorder %s103, %s106
    %p115 = scmp.eq.s32.totalorder %s14, 1
    %p116 = por %p114, %p115
    %p117 = scmp.ne.s32.totalorder %s106, %s107
    %p118 = scmp.eq.s32.totalorder %s14, 0
    %p119 = por %p117, %p118
    %p120 = scmp.ne.s32.totalorder %s106, %s107
    %p121 = scmp.eq.s32.totalorder %s15, 1
    %p122 = por %p120, %p121
    %p124 = scmp.ne.s32.totalorder %s107, %s123
    %p125 = scmp.eq.s32.totalorder %s15, 0
    %p126 = por %p124, %p125
    %p127 = scmp.le.s32.totalorder 1, %s9
    %p128 = scmp.lt.s32.totalorder %s9, 3
    %p129 = pnand %p127, %p128
    %p130 = pneg %p129
    // Predicated region
    $region9: #{conv_block_forward.3} parent=5 // pred_check
      _
    $region10: #{conv_block_forward.3} parent=5 // pred_check_branch
      %132 = sbr.rel (%p129) target = $region12
    $region11: #{conv_block_forward.3} parent=5 // pred_region
      %s133 = ssub.s32 %s9, 1
      // Predicated region
      $region13: #{conv_block_forward.3} parent=11 // pred_check
        %p134 = pneg %p42
      $region14: #{conv_block_forward.3} parent=11 // pred_check_branch
        %136 = sbr.rel (%p134) target = $region16
      $region15: #{conv_block_forward.3} parent=11 // pred_region
        _
      $region16: #{conv_block_forward.3} parent=11 // pred_fallthru
        _
      // Predicated region
      $region17: #{conv_block_forward.3} parent=11 // pred_check
        %p137 = pneg %p63
      $region18: #{conv_block_forward.3} parent=11 // pred_check_branch
        %139 = sbr.rel (%p137) target = $region20
      $region19: #{conv_block_forward.3} parent=11 // pred_region
        _
      $region20: #{conv_block_forward.3} parent=11 // pred_fallthru
        _
    $region12: #{conv_block_forward.3} parent=5 // pred_fallthru
      _
    %p140 = scmp.lt.s32.totalorder %s9, 2
    // Predicated region
    $region21: #{conv_block_forward.3} parent=5 // pred_check
      %p141 = pneg %p140
    $region22: #{conv_block_forward.3} parent=5 // pred_check_branch
      %143 = sbr.rel (%p141) target = $region24
    $region23: #{conv_block_forward.3} parent=5 // pred_region
      // Predicated region
      $region25: #{conv_block_forward.3} parent=23 // pred_check
        %p144 = pneg %p85
      $region26: #{conv_block_forward.3} parent=23 // pred_check_branch
        %146 = sbr.rel (%p144) target = $region28
      $region27: #{conv_block_forward.3} parent=23 // pred_region
        %s147 = smul.u32 2, %s17
        %p148 = scmp.lt.s32.totalorder %s16, 1
        %s149 = scalar_select %p148, %s16, 1
        %p150 = scmp.lt.s32.totalorder %s147, 1
        %s151 = scalar_select %p150, %s147, 1
        %s152 = smul.addr %s149, 2
        %s153 = sadd.s32 %s151, %s152
        %s154 = smul.addr %s153, 4
        %s155 = scalar_lea.vmem %s2, %s154
        %s156 = smul.u32 2, %s17
      $region28: #{conv_block_forward.3} parent=23 // pred_fallthru
        _
    $region24: #{conv_block_forward.3} parent=5 // pred_fallthru
      _
    %p157 = scmp.le.s32.totalorder 1, %s9
    %p158 = scmp.lt.s32.totalorder %s9, 3
    %p159 = pnand %p157, %p158
    %p160 = pneg %p159
    // Predicated region
    $region29: #{conv_block_forward.3} parent=5 // pred_check
      _
    $region30: #{conv_block_forward.3} parent=5 // pred_check_branch
      %162 = sbr.rel (%p159) target = $region32
    $region31: #{conv_block_forward.3} parent=5 // pred_region
      %s163 = ssub.s32 %s9, 1
      %p164 = pneg %p42
      %p165 = pneg %p39
      %p166 = pneg %p63
      %p167 = pneg %p60
      %s168 = smul.u32 2, %s19
      %p169 = scmp.lt.s32.totalorder %s18, 1
      %s170 = scalar_select %p169, %s18, 1
      %p171 = scmp.lt.s32.totalorder %s168, 1
      %s172 = scalar_select %p171, %s168, 1
      %s173 = smul.addr %s170, 2
      %s174 = sadd.s32 %s172, %s173
      %s175 = smul.addr %s174, 4
      %s176 = scalar_lea.vmem %s2, %s175
      %p177 = pneg %p91
      %p178 = pneg %p88
      %p179 = pneg %p119
      %p180 = pneg %p116
      %s181 = smul.u32 2, %s19
      %p182 = scmp.lt.s32.totalorder %s18, 1
      %s183 = scalar_select %p182, %s18, 1
      %p184 = scmp.lt.s32.totalorder %s181, 1
      %s185 = scalar_select %p184, %s181, 1
      %s186 = smul.addr %s183, 2
      %s187 = sadd.s32 %s185, %s186
      %s188 = smul.addr %s187, 8
      %s189 = scalar_lea.vmem %s3, %s188
      %s190 = smul.u32 2, %s19
      %p191 = scmp.lt.s32.totalorder %s18, 1
      %s192 = scalar_select %p191, %s18, 1
      %p193 = scmp.lt.s32.totalorder %s190, 1
      %s194 = scalar_select %p193, %s190, 1
      %s195 = smul.addr %s192, 2
      %s196 = sadd.s32 %s194, %s195
      %s197 = smul.addr %s196, 4
      %s198 = scalar_lea.vmem %s2, %s197
      %s199 = smul.u32 2, %s19
      %s200 = smul.u32 2, %s19
      %p201 = scmp.lt.s32.totalorder %s18, 1
      %s202 = scalar_select %p201, %s18, 1
      %p203 = scmp.lt.s32.totalorder %s200, 1
      %s204 = scalar_select %p203, %s200, 1
      %s205 = smul.addr %s202, 2
      %s206 = sadd.s32 %s204, %s205
      %s207 = smul.addr %s206, 8
      %s208 = scalar_lea.vmem %s3, %s207
      %s209 = smul.u32 2, %s19
      %v210 = vld [vmem:[%s198] sm:$0xff]
      %v211 = vunpack.c.l.bf16 %v210
      %v212 = vunpack.c.h.bf16 %v210
      %v213 = vld [vmem:[%s0] sm:$0xff]
      %215 = vset.pattern.permute.xlu0 0
      %216 = vperm.xlu0 %215, %v213
      %v217 = vpop.permute.xlu0 %216
      %v219 = vmul.f32 %v211, %v217
      %v220 = vmul.f32 %v212, %v217
      %v221 = vld [vmem:[%s1] sm:$0xff]
      %223 = vset.pattern.permute.xlu0 0
      %224 = vperm.xlu0 %223, %v221
      %v225 = vpop.permute.xlu0 %224
      %v227 = vadd.f32 %v219, %v225
      %v228 = vadd.f32 %v220, %v225
      %vm229 = vcmp.ge.f32.partialorder %v227, 0.0
      %vm230 = vcmp.ge.f32.partialorder %v228, 0.0
      %v231 = vmul.f32 %v227, 0.2
      %v232 = vmul.f32 %v228, 0.2
      %v233 = vsel %vm229, %v227, %v231
      %v234 = vsel %vm230, %v228, %v232
      %235 = vst [vmem:[%s208] sm:$0xff] %v233
      %236 = vst [vmem:[%s208 + $0x8] sm:$0xff] %v234
      %s237 = smul.u32 2, %s19
      %p238 = scmp.lt.s32.totalorder %s18, 1
      %s239 = scalar_select %p238, %s18, 1
      %p240 = scmp.lt.s32.totalorder %s237, 1
      %s241 = scalar_select %p240, %s237, 1
      %s242 = smul.addr %s239, 2
      %s243 = sadd.s32 %s241, %s242
      %s244 = smul.addr %s243, 8
      %s245 = scalar_lea.vmem %s3, %s244
      // Predicated region
      $region33: #{conv_block_forward.3} parent=31 // pred_check
        %p246 = pneg %p116
      $region34: #{conv_block_forward.3} parent=31 // pred_check_branch
        %248 = sbr.rel (%p246) target = $region36
      $region35: #{conv_block_forward.3} parent=31 // pred_region
        %s249 = smul.u32 2, %s19
      $region36: #{conv_block_forward.3} parent=31 // pred_fallthru
        _
    $region32: #{conv_block_forward.3} parent=5 // pred_fallthru
      _
    %p250 = scmp.le.s32.totalorder 2, %s9
    // Predicated region
    $region37: #{conv_block_forward.3} parent=5 // pred_check
      %p251 = pneg %p250
    $region38: #{conv_block_forward.3} parent=5 // pred_check_branch
      %253 = sbr.rel (%p251) target = $region40
    $region39: #{conv_block_forward.3} parent=5 // pred_region
      %s254 = ssub.s32 %s9, 2
      // Predicated region
      $region41: #{conv_block_forward.3} parent=39 // pred_check
        %p255 = pneg %p122
      $region42: #{conv_block_forward.3} parent=39 // pred_check_branch
        %257 = sbr.rel (%p255) target = $region44
      $region43: #{conv_block_forward.3} parent=39 // pred_region
        %s258 = smul.u32 2, %s21
        %p259 = scmp.lt.s32.totalorder %s20, 1
        %s260 = scalar_select %p259, %s20, 1
        %p261 = scmp.lt.s32.totalorder %s258, 1
        %s262 = scalar_select %p261, %s258, 1
        %s263 = smul.addr %s260, 2
        %s264 = sadd.s32 %s262, %s263
        %s265 = smul.addr %s264, 8
        %s266 = scalar_lea.vmem %s3, %s265
      $region44: #{conv_block_forward.3} parent=39 // pred_fallthru
        _
    $region40: #{conv_block_forward.3} parent=5 // pred_fallthru
      _
  $region6: #{conv_block_forward.3} parent=0 // loop_footer
    %s13 = sadd.s32 1, %s9
  $region7: #{conv_block_forward.3} parent=0 // loop_footer_branch
    %8 = sbr.rel target = $region3
  $region8: #{conv_block_forward.3} parent=0 // loop_exit
    _

// kernel: conv_block_forward.2
$region0: #{conv_block_forward.2}
  #allocation0 [shape = 'u32[]', space=smem, size = 0x4, offset = 0x4, fixed_abs, tag = 'smem constant byte address 0x4 - core index']
  #allocation1 [shape = 'u32[144,128]{1,0:T(1,128)}', space=vmem, size = 0x12000, scoped, tag = 'internal scratch']
  %s0 = inlined_call_operand.vmem [shape: bf16[8,36], index: 0, kind: input, shape index: {}]
  %s1 = inlined_call_operand.vmem [shape: bf16[2,36,256], index: 1, kind: input, shape index: {}]
  %s2 = inlined_call_operand.vmem [shape: bf16[2,8,256], index: 2, kind: output, shape index: {0}]
  %s3 = inlined_call_operand.vmem [shape: f32[2,1,8,1], index: 3, kind: output, shape index: {1}]
  %s4 = inlined_call_operand.vmem [shape: f32[2,1,8,1], index: 4, kind: output, shape index: {2}]
  %5 = xla_tuple %s2, %s3, %s4
  %s6 = sld [smem:[#allocation0]]
  $region57: #{conv_block_forward.2} parent=0
    _
  %s8 = ssub.s32 1, %s6
  %s9 = scalar_select 0, %s8, %s6
  loop: start=0, step=1, limit=4
  $region2: #{conv_block_forward.2} parent=0 // loop_pre_header
    _
  $region3: #{conv_block_forward.2} parent=0 // loop_header
    %s11 = sphi 0, %s15
    %p12 = scmp.ge.s32.totalorder %s11, 4
    %s18 = sphi 0, %s30
    %s19 = sphi 0, %s26
    %s20 = sphi 0, %s18
    %s21 = sphi 0, %s19
    %s22 = sphi 0, %s20
    %s23 = sphi 0, %s21
    %s31 = sphi 0, %s31
    %s33 = sphi 0, %s31
    %s34 = sphi 0, %s33
    %s48 = sphi 0, %s34
    %s56 = sphi 0, %s58
    %s59 = sphi 0, %s56
    %s60 = sphi 0, %s59
    %s76 = sphi 0, %s60
    %s84 = sphi 0, %s86
    %s87 = sphi 0, %s84
    %s88 = sphi 0, %s87
    %s104 = sphi 0, %s88
    %s112 = sphi 0, %s114
    %s115 = sphi 0, %s112
    %s116 = sphi 0, %s115
    %s132 = sphi 0, %s116
    %s140 = sphi 0, %s142
    %s143 = sphi 0, %s140
    %s144 = sphi 0, %s143
    %s160 = sphi 0, %s144
  $region4: #{conv_block_forward.2} parent=0 // loop_header_branch
    %14 = sbr.rel (%p12) target = $region8
  $region5: #{conv_block_forward.2} parent=0 // loop_body
    %s16 = ssub.s32 %s11, 1
    %s17 = ssub.s32 %s11, 2
    %s24 = sadd.s32 1, %s19
    %p25 = scmp.ge.s32.totalorder %s24, 1
    %s26 = scalar_select %p25, 0, %s24
    %s27 = sadd.s32 1, %s18
    %s28 = scalar_select %p25, %s27, %s18
    %p29 = scmp.ge.s32.totalorder %s28, 2
    %s30 = scalar_select %p29, 0, %s28
    %s32 = sadd.s32 %s31, 1
    %p35 = scmp.eq.s32.totalorder %s11, 1
    %p36 = scmp.ne.s32.totalorder %s31, %s33
    %p37 = scmp.eq.s32.totalorder %s11, 0
    %p38 = por %p36, %p37
    %p39 = scmp.ne.s32.totalorder %s31, %s33
    %p40 = scmp.eq.s32.totalorder %s16, 1
    %p41 = por %p39, %p40
    %p42 = scmp.ne.s32.totalorder %s33, %s34
    %p43 = scmp.eq.s32.totalorder %s16, 0
    %p44 = por %p42, %p43
    %p45 = scmp.ne.s32.totalorder %s33, %s34
    %p46 = scmp.eq.s32.totalorder %s17, 1
    %p47 = por %p45, %p46
    %p49 = scmp.ne.s32.totalorder %s34, %s48
    %p50 = scmp.eq.s32.totalorder %s17, 0
    %p51 = por %p49, %p50
    %s52 = ssub.s32 %s18, %s30
    %s53 = ssub.s32 %s19, %s26
    %s54 = sor.u32 %s52, %s53
    %p55 = scmp.eq.s32.totalorder %s54, 0
    %s57 = sadd.s32 %s56, 1
    %s58 = scalar_select %p55, %s56, %s57
    %p61 = pneg %p55
    %p62 = scmp.eq.s32.totalorder %s11, 1
    %p63 = por %p61, %p62
    %p64 = scmp.ne.s32.totalorder %s56, %s59
    %p65 = scmp.eq.s32.totalorder %s11, 0
    %p66 = por %p64, %p65
    %p67 = scmp.ne.s32.totalorder %s56, %s59
    %p68 = scmp.eq.s32.totalorder %s16, 1
    %p69 = por %p67, %p68
    %p70 = scmp.ne.s32.totalorder %s59, %s60
    %p71 = scmp.eq.s32.totalorder %s16, 0
    %p72 = por %p70, %p71
    %p73 = scmp.ne.s32.totalorder %s59, %s60
    %p74 = scmp.eq.s32.totalorder %s17, 1
    %p75 = por %p73, %p74
    %p77 = scmp.ne.s32.totalorder %s60, %s76
    %p78 = scmp.eq.s32.totalorder %s17, 0
    %p79 = por %p77, %p78
    %s80 = ssub.s32 %s18, %s30
    %s81 = ssub.s32 %s19, %s26
    %s82 = sor.u32 %s80, %s81
    %p83 = scmp.eq.s32.totalorder %s82, 0
    %s85 = sadd.s32 %s84, 1
    %s86 = scalar_select %p83, %s84, %s85
    %p89 = pneg %p83
    %p90 = scmp.eq.s32.totalorder %s11, 1
    %p91 = por %p89, %p90
    %p92 = scmp.ne.s32.totalorder %s84, %s87
    %p93 = scmp.eq.s32.totalorder %s11, 0
    %p94 = por %p92, %p93
    %p95 = scmp.ne.s32.totalorder %s84, %s87
    %p96 = scmp.eq.s32.totalorder %s16, 1
    %p97 = por %p95, %p96
    %p98 = scmp.ne.s32.totalorder %s87, %s88
    %p99 = scmp.eq.s32.totalorder %s16, 0
    %p100 = por %p98, %p99
    %p101 = scmp.ne.s32.totalorder %s87, %s88
    %p102 = scmp.eq.s32.totalorder %s17, 1
    %p103 = por %p101, %p102
    %p105 = scmp.ne.s32.totalorder %s88, %s104
    %p106 = scmp.eq.s32.totalorder %s17, 0
    %p107 = por %p105, %p106
    %s108 = ssub.s32 %s18, %s30
    %s109 = ssub.s32 %s19, %s26
    %s110 = sor.u32 %s108, %s109
    %p111 = scmp.eq.s32.totalorder %s110, 0
    %s113 = sadd.s32 %s112, 1
    %s114 = scalar_select %p111, %s112, %s113
    %p117 = pneg %p111
    %p118 = scmp.eq.s32.totalorder %s11, 1
    %p119 = por %p117, %p118
    %p120 = scmp.ne.s32.totalorder %s112, %s115
    %p121 = scmp.eq.s32.totalorder %s11, 0
    %p122 = por %p120, %p121
    %p123 = scmp.ne.s32.totalorder %s112, %s115
    %p124 = scmp.eq.s32.totalorder %s16, 1
    %p125 = por %p123, %p124
    %p126 = scmp.ne.s32.totalorder %s115, %s116
    %p127 = scmp.eq.s32.totalorder %s16, 0
    %p128 = por %p126, %p127
    %p129 = scmp.ne.s32.totalorder %s115, %s116
    %p130 = scmp.eq.s32.totalorder %s17, 1
    %p131 = por %p129, %p130
    %p133 = scmp.ne.s32.totalorder %s116, %s132
    %p134 = scmp.eq.s32.totalorder %s17, 0
    %p135 = por %p133, %p134
    %s136 = ssub.s32 %s18, %s30
    %s137 = ssub.s32 %s19, %s26
    %s138 = sor.u32 %s136, %s137
    %p139 = scmp.eq.s32.totalorder %s138, 0
    %s141 = sadd.s32 %s140, 1
    %s142 = scalar_select %p139, %s140, %s141
    %p145 = pneg %p139
    %p146 = scmp.eq.s32.totalorder %s11, 1
    %p147 = por %p145, %p146
    %p148 = scmp.ne.s32.totalorder %s140, %s143
    %p149 = scmp.eq.s32.totalorder %s11, 0
    %p150 = por %p148, %p149
    %p151 = scmp.ne.s32.totalorder %s140, %s143
    %p152 = scmp.eq.s32.totalorder %s16, 1
    %p153 = por %p151, %p152
    %p154 = scmp.ne.s32.totalorder %s143, %s144
    %p155 = scmp.eq.s32.totalorder %s16, 0
    %p156 = por %p154, %p155
    %p157 = scmp.ne.s32.totalorder %s143, %s144
    %p158 = scmp.eq.s32.totalorder %s17, 1
    %p159 = por %p157, %p158
    %p161 = scmp.ne.s32.totalorder %s144, %s160
    %p162 = scmp.eq.s32.totalorder %s17, 0
    %p163 = por %p161, %p162
    %p164 = scmp.le.s32.totalorder 1, %s11
    %p165 = scmp.lt.s32.totalorder %s11, 3
    %p166 = pnand %p164, %p165
    %p167 = pneg %p166
    // Predicated region
    $region9: #{conv_block_forward.2} parent=5 // pred_check
      _
    $region10: #{conv_block_forward.2} parent=5 // pred_check_branch
      %169 = sbr.rel (%p166) target = $region12
    $region11: #{conv_block_forward.2} parent=5 // pred_region
      %s170 = ssub.s32 %s11, 1
      // Predicated region
      $region13: #{conv_block_forward.2} parent=11 // pred_check
        %p171 = pneg %p44
      $region14: #{conv_block_forward.2} parent=11 // pred_check_branch
        %173 = sbr.rel (%p171) target = $region16
      $region15: #{conv_block_forward.2} parent=11 // pred_region
        _
      $region16: #{conv_block_forward.2} parent=11 // pred_fallthru
        _
    $region12: #{conv_block_forward.2} parent=5 // pred_fallthru
      _
    %p174 = scmp.lt.s32.totalorder %s11, 2
    // Predicated region
    $region17: #{conv_block_forward.2} parent=5 // pred_check
      %p175 = pneg %p174
    $region18: #{conv_block_forward.2} parent=5 // pred_check_branch
      %177 = sbr.rel (%p175) target = $region20
    $region19: #{conv_block_forward.2} parent=5 // pred_region
      // Predicated region
      $region21: #{conv_block_forward.2} parent=19 // pred_check
        %p178 = pneg %p66
      $region22: #{conv_block_forward.2} parent=19 // pred_check_branch
        %180 = sbr.rel (%p178) target = $region24
      $region23: #{conv_block_forward.2} parent=19 // pred_region
        %s181 = smul.u32 2, %s19
        %p182 = scmp.lt.s32.totalorder %s18, 1
        %s183 = scalar_select %p182, %s18, 1
        %p184 = scmp.lt.s32.totalorder %s181, 1
        %s185 = scalar_select %p184, %s181, 1
        %s186 = smul.addr %s183, 10
        %s187 = sadd.s32 %s185, %s186
        %s188 = smul.addr %s187, 4
        %s189 = scalar_lea.vmem %s1, %s188
        %s190 = smul.u32 2, %s19
      $region24: #{conv_block_forward.2} parent=19 // pred_fallthru
        _
    $region20: #{conv_block_forward.2} parent=5 // pred_fallthru
      _
    %p191 = scmp.le.s32.totalorder 1, %s11
    %p192 = scmp.lt.s32.totalorder %s11, 3
    %p193 = pnand %p191, %p192
    %p194 = pneg %p193
    // Predicated region
    $region25: #{conv_block_forward.2} parent=5 // pred_check
      _
    $region26: #{conv_block_forward.2} parent=5 // pred_check_branch
      %196 = sbr.rel (%p193) target = $region28
    $region27: #{conv_block_forward.2} parent=5 // pred_region
      %s197 = ssub.s32 %s11, 1
      %p198 = pneg %p44
      %p199 = pneg %p41
      %s200 = smul.u32 2, %s21
      %p201 = scmp.lt.s32.totalorder %s20, 1
      %s202 = scalar_select %p201, %s20, 1
      %p203 = scmp.lt.s32.totalorder %s200, 1
      %s204 = scalar_select %p203, %s200, 1
      %s205 = smul.addr %s202, 10
      %s206 = sadd.s32 %s204, %s205
      %s207 = smul.addr %s206, 4
      %s208 = scalar_lea.vmem %s1, %s207
      %p209 = pneg %p72
      %p210 = pneg %p69
      %p211 = pneg %p100
      %p212 = pneg %p97
      %s213 = smul.u32 2, %s21
      %p214 = scmp.lt.s32.totalorder %s20, 1
      %s215 = scalar_select %p214, %s20, 1
      %p216 = scmp.lt.s32.totalorder %s213, 1
      %s217 = scalar_select %p216, %s213, 1
      %s218 = smul.addr %s215, 2
      %s219 = sadd.s32 %s217, %s218
      %s220 = smul.addr %s219, 4
      %s221 = scalar_lea.vmem %s2, %s220
      %p222 = pneg %p128
      %p223 = pneg %p125
      %p224 = scmp.lt.s32.totalorder %s20, 1
      %s225 = scalar_select %p224, %s20, 1
      %p226 = scmp.lt.s32.totalorder %s21, 0
      %s227 = scalar_select %p226, %s21, 0
      %s228 = sadd.s32 %s227, %s225
      %s229 = smul.addr %s228, 8
      %s230 = scalar_lea.vmem %s3, %s229
      %p231 = pneg %p156
      %p232 = pneg %p153
      %p233 = scmp.lt.s32.totalorder %s20, 1
      %s234 = scalar_select %p233, %s20, 1
      %p235 = scmp.lt.s32.totalorder %s21, 0
      %s236 = scalar_select %p235, %s21, 0
      %s237 = sadd.s32 %s236, %s234
      %s238 = smul.addr %s237, 8
      %s239 = scalar_lea.vmem %s4, %s238
      %s240 = smul.u32 2, %s21
      %p241 = scmp.lt.s32.totalorder %s20, 1
      %s242 = scalar_select %p241, %s20, 1
      %p243 = scmp.lt.s32.totalorder %s240, 1
      %s244 = scalar_select %p243, %s240, 1
      %s245 = smul.addr %s242, 10
      %s246 = sadd.s32 %s244, %s245
      %s247 = smul.addr %s246, 4
      %s248 = scalar_lea.vmem %s1, %s247
      %s249 = smul.u32 2, %s21
      %s250 = smul.u32 2, %s21
      %p251 = scmp.lt.s32.totalorder %s20, 1
      %s252 = scalar_select %p251, %s20, 1
      %p253 = scmp.lt.s32.totalorder %s250, 1
      %s254 = scalar_select %p253, %s250, 1
      %s255 = smul.addr %s252, 2
      %s256 = sadd.s32 %s254, %s255
      %s257 = smul.addr %s256, 4
      %s258 = scalar_lea.vmem %s2, %s257
      %s259 = smul.u32 2, %s21
      %p260 = scmp.lt.s32.totalorder %s20, 1
      %s261 = scalar_select %p260, %s20, 1
      %p262 = scmp.lt.s32.totalorder %s21, 0
      %s263 = scalar_select %p262, %s21, 0
      %s264 = sadd.s32 %s263, %s261
      %s265 = smul.addr %s264, 8
      %s266 = scalar_lea.vmem %s3, %s265
      %p267 = scmp.lt.s32.totalorder %s20, 1
      %s268 = scalar_select %p267, %s20, 1
      %p269 = scmp.lt.s32.totalorder %s21, 0
      %s270 = scalar_select %p269, %s21, 0
      %s271 = sadd.s32 %s270, %s268
      %s272 = smul.addr %s271, 8
      %s273 = scalar_lea.vmem %s4, %s272
      %v275 = vld [vmem:[%s0] sm:$0xf]
      %v276 = vld [vmem:[%s248] sm:$0xff]
      %v277 = vld [vmem:[%s248 + $0x8] sm:$0xff]
      %v278 = vld [vmem:[%s248 + $0x10] sm:$0xff]
      %v279 = vld [vmem:[%s248 + $0x18] sm:$0xff]
      %v280 = vld [vmem:[%s248 + $0x20] sm:$0x33]
      %v286 = vunpack.c.l.b16 %v276
      %v287 = vunpack.c.h.b16 %v276
      %v288 = vunpack.c.l.b16 %v277
      %v289 = vunpack.c.h.b16 %v277
      %v290 = vunpack.c.l.b16 %v278
      %v291 = vunpack.c.h.b16 %v278
      %v292 = vunpack.c.l.b16 %v279
      %v293 = vunpack.c.h.b16 %v279
      %v294 = vunpack.c.l.b16 %v280
      %v295 = vunpack.c.h.b16 %v280
      %v296 = vpack.c.b16 %v288, %v286
      %v297 = vpack.c.b16 %v289, %v287
      %v298 = vpack.c.b16 %v292, %v290
      %v299 = vpack.c.b16 %v293, %v291
      %v300 = vpack.c.b16 %v294, %v294
      %v301 = vpack.c.b16 %v295, %v295
      %vm306 = vcmask 293888
      %v308 = vsel %vm306, %v275, 0
      %vm310 = vcmask 1041408
      %v312 = vsel %vm310, %v300, 0
      %v315 = vsel %vm310, %v301, 0
      %317 = vmatprep.subr.bf16.mxu0 %v297
      %318 = vmatpush1.bf16.msra.mxu0 %v296
      %319 = vmatprep.subr.bf16.mxu0 %v299
      %320 = vmatpush1.bf16.msra.mxu0 %v298
      %321 = vmatprep.subr.bf16.mxu0 %v315
      %322 = vmatpush1.bf16.msra.mxu0 %v312
      %323 = vmatprep.subr.bf16.mxu0 0
      %324 = vmatpush1.bf16.msra.mxu0 0
      %325 = vmatprep.subr.bf16.mxu0 0
      %326 = vmatpush1.bf16.msra.mxu0 0
      %327 = vmatprep.subr.bf16.mxu0 0
      %328 = vmatpush1.bf16.msra.mxu0 0
      %329 = vmatprep.subr.bf16.mxu0 0
      %330 = vmatpush1.bf16.msra.mxu0 0
      %331 = vmatprep.subr.bf16.mxu0 0
      %332 = vmatpush1.bf16.msra.mxu0 0
      %333 = vmatprep.subr.bf16.mxu0 0
      %334 = vmatpush1.bf16.msra.mxu0 0
      %335 = vmatprep.subr.bf16.mxu0 0
      %336 = vmatpush1.bf16.msra.mxu0 0
      %337 = vmatprep.subr.bf16.mxu0 0
      %338 = vmatpush1.bf16.msra.mxu0 0
      %339 = vmatprep.subr.bf16.mxu0 0
      %340 = vmatpush1.bf16.msra.mxu0 0
      %341 = vmatprep.subr.bf16.mxu0 0
      %342 = vmatpush1.bf16.msra.mxu0 0
      %343 = vmatprep.subr.bf16.mxu0 0
      %344 = vmatpush1.bf16.msra.mxu0 0
      %345 = vmatprep.subr.bf16.mxu0 0
      %346 = vmatpush1.bf16.msra.mxu0 0
      %347 = vmatprep.subr.bf16.mxu0 0
      %348 = vmatpush1.bf16.msra.mxu0 0
      %349 = vmatprep.mubr.bf16.mxu0 0
      %350 = vmatmul.mubr.bf16.gmra.mrb[0].mxu0 %v308
      %v351 = vpop.f32.mrb[0].mxu0
      %v352 = vadd.f32 0.0, %v351
      %v353 = vpop.f32.mrb[0].mxu0
      %v354 = vadd.f32 0.0, %v353
      %v355 = vpop.f32.mrb[0].mxu0
      %v356 = vpop.f32.mrb[0].mxu0
      %357 = vdwg.mxu0
      %v358 = vpack.c.bf16 %v352, %v352
      %v359 = vpack.c.bf16 %v354, %v354
      %v362 = vunpack.c.l.b16 %v358
      %v363 = vunpack.c.l.b16 %v359
      %v364 = vpack.c.b16 %v363, %v362
      %366 = vst [vmem:[%s258] sm:$0xff] %v364
      %v367 = vadd.f32 %v352, %v354
      %368 = vadd.xlane.f32.xlu0 %v367
      %v369 = vpop.xlane.xlu0 %368
      %vm370 = vcmask 7168
      %371 = vst.msk [vmem:[%s266] sm:$0xff] %vm370, %v369
      %v372 = vmul.f32 %v352, %v352
      %v373 = vmul.f32 %v354, %v354
      %v374 = vadd.f32 %v372, %v373
      %375 = vadd.xlane.f32.xlu0 %v374
      %v376 = vpop.xlane.xlu0 %375
      %377 = vst.msk [vmem:[%s273] sm:$0xff] %vm370, %v376
      %s378 = smul.u32 2, %s21
      %p379 = scmp.lt.s32.totalorder %s20, 1
      %s380 = scalar_select %p379, %s20, 1
      %p381 = scmp.lt.s32.totalorder %s378, 1
      %s382 = scalar_select %p381, %s378, 1
      %s383 = smul.addr %s380, 2
      %s384 = sadd.s32 %s382, %s383
      %s385 = smul.addr %s384, 4
      %s386 = scalar_lea.vmem %s2, %s385
      %p387 = scmp.lt.s32.totalorder %s20, 1
      %s388 = scalar_select %p387, %s20, 1
      %p389 = scmp.lt.s32.totalorder %s21, 0
      %s390 = scalar_select %p389, %s21, 0
      %s391 = sadd.s32 %s390, %s388
      %s392 = smul.addr %s391, 8
      %s393 = scalar_lea.vmem %s3, %s392
      %p394 = scmp.lt.s32.totalorder %s20, 1
      %s395 = scalar_select %p394, %s20, 1
      %p396 = scmp.lt.s32.totalorder %s21, 0
      %s397 = scalar_select %p396, %s21, 0
      %s398 = sadd.s32 %s397, %s395
      %s399 = smul.addr %s398, 8
      %s400 = scalar_lea.vmem %s4, %s399
      // Predicated region
      $region29: #{conv_block_forward.2} parent=27 // pred_check
        %p401 = pneg %p97
      $region30: #{conv_block_forward.2} parent=27 // pred_check_branch
        %403 = sbr.rel (%p401) target = $region32
      $region31: #{conv_block_forward.2} parent=27 // pred_region
        %s404 = smul.u32 2, %s21
      $region32: #{conv_block_forward.2} parent=27 // pred_fallthru
        _
      // Predicated region
      $region33: #{conv_block_forward.2} parent=27 // pred_check
        %p405 = pneg %p125
      $region34: #{conv_block_forward.2} parent=27 // pred_check_branch
        %407 = sbr.rel (%p405) target = $region36
      $region35: #{conv_block_forward.2} parent=27 // pred_region
        _
      $region36: #{conv_block_forward.2} parent=27 // pred_fallthru
        _
      // Predicated region
      $region37: #{conv_block_forward.2} parent=27 // pred_check
        %p408 = pneg %p153
      $region38: #{conv_block_forward.2} parent=27 // pred_check_branch
        %410 = sbr.rel (%p408) target = $region40
      $region39: #{conv_block_forward.2} parent=27 // pred_region
        _
      $region40: #{conv_block_forward.2} parent=27 // pred_fallthru
        _
    $region28: #{conv_block_forward.2} parent=5 // pred_fallthru
      _
    %p411 = scmp.le.s32.totalorder 2, %s11
    // Predicated region
    $region41: #{conv_block_forward.2} parent=5 // pred_check
      %p412 = pneg %p411
    $region42: #{conv_block_forward.2} parent=5 // pred_check_branch
      %414 = sbr.rel (%p412) target = $region44
    $region43: #{conv_block_forward.2} parent=5 // pred_region
      %s415 = ssub.s32 %s11, 2
      // Predicated region
      $region45: #{conv_block_forward.2} parent=43 // pred_check
        %p416 = pneg %p103
      $region46: #{conv_block_forward.2} parent=43 // pred_check_branch
        %418 = sbr.rel (%p416) target = $region48
      $region47: #{conv_block_forward.2} parent=43 // pred_region
        %s419 = smul.u32 2, %s23
        %p420 = scmp.lt.s32.totalorder %s22, 1
        %s421 = scalar_select %p420, %s22, 1
        %p422 = scmp.lt.s32.totalorder %s419, 1
        %s423 = scalar_select %p422, %s419, 1
        %s424 = smul.addr %s421, 2
        %s425 = sadd.s32 %s423, %s424
        %s426 = smul.addr %s425, 4
        %s427 = scalar_lea.vmem %s2, %s426
      $region48: #{conv_block_forward.2} parent=43 // pred_fallthru
        _
      // Predicated region
      $region49: #{conv_block_forward.2} parent=43 // pred_check
        %p428 = pneg %p131
      $region50: #{conv_block_forward.2} parent=43 // pred_check_branch
        %430 = sbr.rel (%p428) target = $region52
      $region51: #{conv_block_forward.2} parent=43 // pred_region
        %p431 = scmp.lt.s32.totalorder %s22, 1
        %s432 = scalar_select %p431, %s22, 1
        %p433 = scmp.lt.s32.totalorder %s23, 0
        %s434 = scalar_select %p433, %s23, 0
        %s435 = sadd.s32 %s434, %s432
        %s436 = smul.addr %s435, 8
        %s437 = scalar_lea.vmem %s3, %s436
      $region52: #{conv_block_forward.2} parent=43 // pred_fallthru
        _
      // Predicated region
      $region53: #{conv_block_forward.2} parent=43 // pred_check
        %p438 = pneg %p159
      $region54: #{conv_block_forward.2} parent=43 // pred_check_branch
        %440 = sbr.rel (%p438) target = $region56
      $region55: #{conv_block_forward.2} parent=43 // pred_region
        %p441 = scmp.lt.s32.totalorder %s22, 1
        %s442 = scalar_select %p441, %s22, 1
        %p443 = scmp.lt.s32.totalorder %s23, 0
        %s444 = scalar_select %p443, %s23, 0
        %s445 = sadd.s32 %s444, %s442
        %s446 = smul.addr %s445, 8
        %s447 = scalar_lea.vmem %s4, %s446
      $region56: #{conv_block_forward.2} parent=43 // pred_fallthru
        _
    $region44: #{conv_block_forward.2} parent=5 // pred_fallthru
      _
  $region6: #{conv_block_forward.2} parent=0 // loop_footer
    %s15 = sadd.s32 1, %s11
  $region7: #{conv_block_forward.2} parent=0 // loop_footer_branch
    %10 = sbr.rel target = $region3
  $region8: #{conv_block_forward.2} parent=0 // loop_exit
    _

</llo_original>
